<compile_context>
chip_gen: v7x
topology: tpu7x:2x2x1
jax: 0.10.0
libtpu: 0.0.40
codegen_flags: <defaults>
</compile_context>

<pallas_src>
import functools
import numpy as np
import jax
import jax.numpy as jnp
from jax.experimental import pallas as pl
from jax.experimental.pallas import tpu as pltpu

VMEM_SPEC = pl.BlockSpec(memory_space=pltpu.MemorySpace.VMEM)
_PARALLEL_1D = pltpu.CompilerParams(dimension_semantics=("parallel",))


def _pick_tile_m(m):
    """Largest MXU/lane-friendly row tile that divides M (falls back to full M)."""
    for tm in (256, 128, 64, 32, 16, 8):
        if m % tm == 0:
            return tm
    return m


# -------------------- Pallas kernels (hot paths) --------------------

def _matmul_kernel(x_ref, w_ref, b_ref, o_ref, *, activation):
    # bf16 matmul operands, f32 accumulation; activation math in f32 (v5e-safe).
    y = jnp.dot(x_ref[...].astype(jnp.bfloat16),
                w_ref[...].astype(jnp.bfloat16),
                preferred_element_type=jnp.float32)
    y = y + b_ref[...]
    if activation == "gelu":
        # TODO(synk): HF BERT uses exact (erf) GELU; tanh approximation kept here
        # for guaranteed Mosaic lowering -- expect tiny numeric drift.
        y = jax.nn.gelu(y, approximate=True)
    o_ref[...] = y


def linear(x, w, b, activation=None):
    """y = act(x @ w + b); x: [M,K], w: [K,N], b: [N]. Tiled over M (parallel)."""
    M, K = x.shape
    N = w.shape[1]
    tm = _pick_tile_m(M)
    return pl.pallas_call(
        functools.partial(_matmul_kernel, activation=activation),
        out_shape=jax.ShapeDtypeStruct((M, N), jnp.float32),
        grid=(M // tm,),
        in_specs=[pl.BlockSpec((tm, K), lambda i: (i, 0)),
                  pl.BlockSpec((K, N), lambda i: (0, 0)),
                  pl.BlockSpec((1, N), lambda i: (0, 0))],
        out_specs=pl.BlockSpec((tm, N), lambda i: (i, 0)),
        compiler_params=_PARALLEL_1D,
    )(x, w, b.reshape(1, N))


def _matmul_res_ln_kernel(x_ref, w_ref, b_ref, r_ref, g_ref, bb_ref, o_ref, *, eps):
    # matmul (bf16 operands, f32 acc) + residual add + LayerNorm epilogue.
    y = jnp.dot(x_ref[...].astype(jnp.bfloat16),
                w_ref[...].astype(jnp.bfloat16),
                preferred_element_type=jnp.float32)
    y = y + b_ref[...] + r_ref[...]
    mu = jnp.mean(y, axis=-1, keepdims=True)
    var = jnp.mean(jnp.square(y - mu), axis=-1, keepdims=True)
    o_ref[...] = (y - mu) * jax.lax.rsqrt(var + eps) * g_ref[...] + bb_ref[...]


def linear_residual_ln(x, w, b, residual, gamma, beta, eps=1e-12):
    """LayerNorm((x @ w + b) + residual) fused in one kernel; tiled over M."""
    # TODO(synk): at production scale (H=768+) tile K with a f32 VMEM accumulator;
    # N must stay whole per block because LN reduces over it.
    M, K = x.shape
    N = w.shape[1]
    tm = _pick_tile_m(M)
    return pl.pallas_call(
        functools.partial(_matmul_res_ln_kernel, eps=eps),
        out_shape=jax.ShapeDtypeStruct((M, N), jnp.float32),
        grid=(M // tm,),
        in_specs=[pl.BlockSpec((tm, K), lambda i: (i, 0)),
                  pl.BlockSpec((K, N), lambda i: (0, 0)),
                  pl.BlockSpec((1, N), lambda i: (0, 0)),
                  pl.BlockSpec((tm, N), lambda i: (i, 0)),
                  pl.BlockSpec((1, N), lambda i: (0, 0)),
                  pl.BlockSpec((1, N), lambda i: (0, 0))],
        out_specs=pl.BlockSpec((tm, N), lambda i: (i, 0)),
        compiler_params=_PARALLEL_1D,
    )(x, w, b.reshape(1, N), residual, gamma.reshape(1, N), beta.reshape(1, N))


def _layernorm_kernel(x_ref, g_ref, b_ref, o_ref, *, eps):
    x = x_ref[...]
    mu = jnp.mean(x, axis=-1, keepdims=True)
    var = jnp.mean(jnp.square(x - mu), axis=-1, keepdims=True)
    o_ref[...] = ((x - mu) * jax.lax.rsqrt(var + eps)) * g_ref[...] + b_ref[...]


def layer_norm(x, gamma, beta, eps=1e-12):
    M, H = x.shape
    tm = _pick_tile_m(M)
    return pl.pallas_call(
        functools.partial(_layernorm_kernel, eps=eps),
        out_shape=jax.ShapeDtypeStruct((M, H), jnp.float32),
        grid=(M // tm,),
        in_specs=[pl.BlockSpec((tm, H), lambda i: (i, 0)),
                  pl.BlockSpec((1, H), lambda i: (0, 0)),
                  pl.BlockSpec((1, H), lambda i: (0, 0))],
        out_specs=pl.BlockSpec((tm, H), lambda i: (i, 0)),
        compiler_params=_PARALLEL_1D,
    )(x, gamma.reshape(1, H), beta.reshape(1, H))


def _attention_kernel(q_ref, k_ref, v_ref, m_ref, o_ref, *p_refs, scale):
    # per-(batch*head) block: q/k/v are (1, S, Dh), mask (1, 1, S).
    q = q_ref[...].astype(jnp.bfloat16)
    k = k_ref[...].astype(jnp.bfloat16)
    s = jnp.einsum("bqd,bkd->bqk", q, k, preferred_element_type=jnp.float32)
    s = s * scale + m_ref[...]                       # additive mask (-1e4 on pad)
    s = s - jnp.max(s, axis=-1, keepdims=True)       # softmax math in f32 (v5e)
    e = jnp.exp(s)
    denom = jnp.sum(e, axis=-1, keepdims=True)
    p = e * pl.reciprocal(denom, approx=True)        # EUP reciprocal, VPU mul
    o_ref[...] = jnp.einsum("bqk,bkd->bqd", p.astype(jnp.bfloat16),
                            v_ref[...].astype(jnp.bfloat16),
                            preferred_element_type=jnp.float32)
    if p_refs:                                       # only when distillation needs it
        p_refs[0][...] = p


def attention(q, k, v, add_mask, scale, need_probs):
    """q/k/v: [B*NH, S, Dh]; add_mask: [B*NH, 1, S]. Grid over B*NH (parallel)."""
    BH, S, Dh = q.shape
    qkv_spec = pl.BlockSpec((1, S, Dh), lambda i: (i, 0, 0))
    m_spec = pl.BlockSpec((1, 1, S), lambda i: (i, 0, 0))
    o_spec = pl.BlockSpec((1, S, Dh), lambda i: (i, 0, 0))
    if need_probs:
        out_shape = (jax.ShapeDtypeStruct((BH, S, Dh), jnp.float32),
                     jax.ShapeDtypeStruct((BH, S, S), jnp.float32))
        out_specs = (o_spec, pl.BlockSpec((1, S, S), lambda i: (i, 0, 0)))
    else:
        out_shape = jax.ShapeDtypeStruct((BH, S, Dh), jnp.float32)
        out_specs = o_spec
    return pl.pallas_call(
        functools.partial(_attention_kernel, scale=scale),
        out_shape=out_shape,
        grid=(BH,),
        in_specs=[qkv_spec, qkv_spec, qkv_spec, m_spec],
        out_specs=out_specs,
        compiler_params=_PARALLEL_1D,
    )(q, k, v, add_mask)


def _extractive_head_kernel(x_ref, w_ref, b_ref, o_ref):
    # lane-dense replacement for the N=1 Linear(H,1): logits laid out along
    # lanes as a [1, M] row (unmasked vst) instead of a [M, 1] column.
    x = x_ref[...].astype(jnp.bfloat16)      # [M, H]
    w = w_ref[...].astype(jnp.bfloat16)      # [1, H]
    y = jnp.einsum("ch,mh->cm", w, x, preferred_element_type=jnp.float32)  # [1, M]
    o_ref[...] = y + b_ref[...]


def extractive_head(x, w, b):
    """per-token logits (Linear(H,1)) as a lane-dense [1, M] kernel; returns [M]."""
    M, H = x.shape
    out = pl.pallas_call(
        _extractive_head_kernel,
        out_shape=jax.ShapeDtypeStruct((1, M), jnp.float32),
        in_specs=[VMEM_SPEC, VMEM_SPEC, VMEM_SPEC],
        out_specs=VMEM_SPEC,
    )(x, w.reshape(1, H) if w.shape == (H, 1) else w.T.reshape(1, H), b.reshape(1, 1))
    return out.reshape(-1)


# -------------------- tiny BERT student (deterministic init) --------------------

class Cfg:
    vocab_size = 100
    hidden_size = 32
    num_layers = 2
    num_heads = 2
    intermediate_size = 64
    max_position = 16
    type_vocab_size = 2


def _dense(key, fan_in, fan_out):
    kw, _ = jax.random.split(key)
    return {"w": 0.02 * jax.random.normal(kw, (fan_in, fan_out), jnp.float32),
            "b": jnp.zeros((fan_out,), jnp.float32)}


def init_student(key, cfg):
    keys = jax.random.split(key, 3 + cfg.num_layers)
    params = {
        "word_emb": 0.02 * jax.random.normal(keys[0], (cfg.vocab_size, cfg.hidden_size), jnp.float32),
        "pos_emb": 0.02 * jax.random.normal(keys[1], (cfg.max_position, cfg.hidden_size), jnp.float32),
        "type_emb": 0.02 * jax.random.normal(keys[2], (cfg.type_vocab_size, cfg.hidden_size), jnp.float32),
        "emb_ln_g": jnp.ones((cfg.hidden_size,), jnp.float32),
        "emb_ln_b": jnp.zeros((cfg.hidden_size,), jnp.float32),
        "layers": [],
    }
    for l in range(cfg.num_layers):
        lk = jax.random.split(keys[3 + l], 6)
        params["layers"].append({
            "q": _dense(lk[0], cfg.hidden_size, cfg.hidden_size),
            "k": _dense(lk[1], cfg.hidden_size, cfg.hidden_size),
            "v": _dense(lk[2], cfg.hidden_size, cfg.hidden_size),
            "o": _dense(lk[3], cfg.hidden_size, cfg.hidden_size),
            "attn_ln_g": jnp.ones((cfg.hidden_size,), jnp.float32),
            "attn_ln_b": jnp.zeros((cfg.hidden_size,), jnp.float32),
            "ffn_in": _dense(lk[4], cfg.hidden_size, cfg.intermediate_size),
            "ffn_out": _dense(lk[5], cfg.intermediate_size, cfg.hidden_size),
            "ffn_ln_g": jnp.ones((cfg.hidden_size,), jnp.float32),
            "ffn_ln_b": jnp.zeros((cfg.hidden_size,), jnp.float32),
        })
    return params


def bert_forward(params, cfg, input_ids, attn_mask, token_type_ids, need_attn=True):
    B, S = input_ids.shape
    H, NH = cfg.hidden_size, cfg.num_heads
    Dh = H // NH

    # embeddings (lookup glue) + Pallas layernorm
    pos_ids = jnp.arange(S)
    emb = (jnp.take(params["word_emb"], input_ids, axis=0)
           + jnp.take(params["pos_emb"], pos_ids, axis=0)[None, :, :]
           + jnp.take(params["type_emb"], token_type_ids, axis=0))
    hidden = layer_norm(emb.reshape(B * S, H),
                        params["emb_ln_g"], params["emb_ln_b"]).reshape(B, S, H)

    add_mask = (1.0 - attn_mask.astype(jnp.float32)) * -10000.0          # (B, S)
    add_mask = jnp.broadcast_to(add_mask[:, None, None, :],
                                (B, NH, 1, S)).reshape(B * NH, 1, S)

    hidden_states = [hidden]   # HF convention: hidden_states[0] = embedding output
    attentions = []
    scale = 1.0 / float(np.sqrt(Dh))

    for layer in params["layers"]:
        x2 = hidden.reshape(B * S, H)

        # fused QKV projection: one [H, 3H] matmul instead of three [H, H].
        wqkv = jnp.concatenate([layer["q"]["w"], layer["k"]["w"], layer["v"]["w"]], axis=1)
        bqkv = jnp.concatenate([layer["q"]["b"], layer["k"]["b"], layer["v"]["b"]], axis=0)
        qkv = linear(x2, wqkv, bqkv)                                      # [B*S, 3H]
        # TODO(synk): at production scale (Dh >= 128) fold the head split/merge
        # into the attention kernel via per-head BlockSpec index maps; at this toy
        # scale the lane dims are below the 128-lane tile so JAX glue is kept.
        qkv = qkv.reshape(B, S, 3, NH, Dh).transpose(2, 0, 3, 1, 4).reshape(3, B * NH, S, Dh)

        if need_attn:
            ctx, probs = attention(qkv[0], qkv[1], qkv[2], add_mask, scale, need_probs=True)
            attentions.append(probs.reshape(B, NH, S, S))
        else:
            ctx = attention(qkv[0], qkv[1], qkv[2], add_mask, scale, need_probs=False)
        ctx = ctx.reshape(B, NH, S, Dh).transpose(0, 2, 1, 3).reshape(B * S, H)

        # attention output projection fused with residual add + LayerNorm.
        hidden2 = linear_residual_ln(ctx, layer["o"]["w"], layer["o"]["b"], x2,
                                     layer["attn_ln_g"], layer["attn_ln_b"])
        inter = linear(hidden2, layer["ffn_in"]["w"], layer["ffn_in"]["b"], activation="gelu")
        # FFN output projection fused with residual add + LayerNorm.
        hidden = linear_residual_ln(inter, layer["ffn_out"]["w"], layer["ffn_out"]["b"],
                                    hidden2, layer["ffn_ln_g"],
                                    layer["ffn_ln_b"]).reshape(B, S, H)
        hidden_states.append(hidden)

    return hidden, hidden_states, attentions


# -------------------- ClusterSum.forward --------------------

def cluster_sum_forward(all_params, cfg, input_ids, attn_mask, seg, cls_flat_idx,
                        specific_student=None, distill_step=False, do_adversary=False,
                        extractive_summary=True):
    all_logits, all_encoder_layers, all_encoder_atts, all_embeds = [], [], [], []
    B, S = input_ids.shape
    H = cfg.hidden_size
    for i, p in enumerate(all_params["students"]):
        if specific_student is not None and i != specific_student:
            continue
        # output_attentions=distill_step (matches the torch module): the probs
        # HBM write is skipped entirely when not distilling.
        last_hidden, hidden_states, attentions = bert_forward(
            p, cfg, input_ids, attn_mask, seg, need_attn=distill_step)
        if extractive_summary:
            # ExtractiveSummaryHead: per-token Linear(H,1) as a lane-dense
            # row-reduction kernel, then static gather of the CLS slots.
            per_tok = extractive_head(last_hidden.reshape(B * S, H),
                                      all_params["head"][i]["w"],
                                      all_params["head"][i]["b"])
            logits = jnp.take(per_tok, cls_flat_idx)
        else:
            # GlueTaskHead: Linear on the [CLS] (position 0) representation.
            logits = linear(last_hidden[:, 0, :],
                            all_params["head"][i]["w"], all_params["head"][i]["b"])
        all_logits.append(logits)
        if distill_step:
            # batched fit_dense: one matmul over all (L+1) stacked hidden states.
            L1 = len(hidden_states)
            hs_all = jnp.stack(hidden_states, axis=0).reshape(L1 * B * S, H)
            fit = linear(hs_all, all_params["fit_dense"][i]["w"],
                         all_params["fit_dense"][i]["b"]).reshape(L1, B, S, -1)
            all_encoder_layers.append([fit[j] for j in range(L1)])
            all_encoder_atts.append(attentions)
        if do_adversary:
            all_embeds.append(hidden_states[0])
    return all_logits, all_encoder_layers, all_encoder_atts, all_embeds


# -------------------- demo --------------------

if __name__ == "__main__":
    cfg = Cfg()
    student_num = 2
    fit_size = 64          # stands in for the 768 "fit_size" at toy scale

    key = jax.random.PRNGKey(0)
    ks = jax.random.split(key, 3 * student_num + 2)
    all_params = {"students": [], "head": [], "fit_dense": []}
    for i in range(student_num):
        all_params["students"].append(init_student(ks[3 * i], cfg))
        all_params["head"].append({
            "w": 0.02 * jax.random.normal(ks[3 * i + 1], (cfg.hidden_size, 1), jnp.float32),
            "b": jnp.zeros((1,), jnp.float32)})
        all_params["fit_dense"].append({
            "w": 0.02 * jax.random.normal(ks[3 * i + 2], (cfg.hidden_size, fit_size), jnp.float32),
            "b": jnp.zeros((fit_size,), jnp.float32)})

    B, S = 2, 8
    dk = jax.random.split(ks[-1], 2)
    input_ids = jax.random.randint(dk[0], (B, S), 0, cfg.vocab_size, dtype=jnp.int32)
    attn_mask = jnp.ones((B, S), jnp.float32)
    seg = jnp.zeros((B, S), jnp.int32)

    # cls_mask: two "sentence" CLS tokens per document (static in-script).
    cls_mask_np = np.zeros((B, S), dtype=bool)
    cls_mask_np[:, 0] = True
    cls_mask_np[:, 4] = True
    # TODO(synk): torch masked_select produces a dynamic-shape output; here the
    # mask is static so the gather indices are precomputed on the host.
    cls_flat_idx = jnp.asarray(np.nonzero(cls_mask_np.reshape(-1))[0], dtype=jnp.int32)

    outs = cluster_sum_forward(all_params, cfg, input_ids, attn_mask, seg, cls_flat_idx,
                               specific_student=None, distill_step=True, do_adversary=True,
                               extractive_summary=True)
    outs = jax.block_until_ready(outs)

    all_logits, all_enc_layers, all_enc_atts, all_embeds = outs
    assert len(all_logits) == student_num and all_logits[0].shape == (int(cls_mask_np.sum()),)
    assert len(all_enc_layers[0]) == cfg.num_layers + 1
    assert all_enc_layers[0][0].shape == (B, S, fit_size)
    assert all_enc_atts[0][0].shape == (B, cfg.num_heads, S, S)
    assert all_embeds[0].shape == (B, S, cfg.hidden_size)
    assert all(bool(jnp.all(jnp.isfinite(l))) for l in all_logits)
    print("KERNEL_OK")
</pallas_src>

<mosaic_0001>
module attributes {stable_mosaic.version = 11 : i64} {
  func.func @_layernorm_kernel(%arg0: i32, %arg1: memref<16x32xf32, #tpu.memory_space<vmem>>, %arg2: memref<1x32xf32, #tpu.memory_space<vmem>>, %arg3: memref<1x32xf32, #tpu.memory_space<vmem>>, %arg4: memref<16x32xf32, #tpu.memory_space<vmem>>) attributes {dimension_semantics = [#tpu.dimension_semantics<parallel>], iteration_bounds = array<i64: 1>, scalar_prefetch = 0 : i64, scratch_operands = 0 : i64, tpu.core_type = #tpu.core_type<tc>, window_params = [{transform_indices = @transform_0, window_bounds = array<i64: 16, 32>}, {pipeline_mode = #tpu.pipeline_mode<synchronous>, transform_indices = @transform_1, window_bounds = array<i64: 1, 32>}, {pipeline_mode = #tpu.pipeline_mode<synchronous>, transform_indices = @transform_2, window_bounds = array<i64: 1, 32>}, {transform_indices = @transform_3, window_bounds = array<i64: 16, 32>}]} {
    %c0 = arith.constant 0 : index
    %c0_0 = arith.constant 0 : index
    %0 = vector.load %arg1[%c0, %c0_0] : memref<16x32xf32, #tpu.memory_space<vmem>>, vector<16x32xf32>
    %cst = arith.constant dense<0.000000e+00> : vector<16xf32>
    %1 = vector.multi_reduction <add>, %0, %cst [1] : vector<16x32xf32> to vector<16xf32>
    %2 = vector.shape_cast %1 : vector<16xf32> to vector<16x1xf32>
    %cst_1 = arith.constant 3.200000e+01 : f32
    %3 = vector.broadcast %cst_1 : f32 to vector<16x1xf32>
    %4 = arith.divf %2, %3 : vector<16x1xf32>
    %5 = vector.broadcast %4 : vector<16x1xf32> to vector<16x32xf32>
    %6 = arith.subf %0, %5 : vector<16x32xf32>
    %7 = arith.mulf %6, %6 : vector<16x32xf32>
    %cst_2 = arith.constant dense<0.000000e+00> : vector<16xf32>
    %8 = vector.multi_reduction <add>, %7, %cst_2 [1] : vector<16x32xf32> to vector<16xf32>
    %9 = vector.shape_cast %8 : vector<16xf32> to vector<16x1xf32>
    %cst_3 = arith.constant 3.200000e+01 : f32
    %10 = vector.broadcast %cst_3 : f32 to vector<16x1xf32>
    %11 = arith.divf %9, %10 : vector<16x1xf32>
    %12 = vector.broadcast %4 : vector<16x1xf32> to vector<16x32xf32>
    %13 = arith.subf %0, %12 : vector<16x32xf32>
    %cst_4 = arith.constant 9.99999996E-13 : f32
    %14 = vector.broadcast %cst_4 : f32 to vector<16x1xf32>
    %15 = arith.addf %11, %14 : vector<16x1xf32>
    %16 = math.rsqrt %15 : vector<16x1xf32>
    %17 = vector.broadcast %16 : vector<16x1xf32> to vector<16x32xf32>
    %18 = arith.mulf %13, %17 : vector<16x32xf32>
    %c0_5 = arith.constant 0 : index
    %c0_6 = arith.constant 0 : index
    %19 = vector.load %arg2[%c0_5, %c0_6] : memref<1x32xf32, #tpu.memory_space<vmem>>, vector<1x32xf32>
    %20 = vector.broadcast %19 : vector<1x32xf32> to vector<16x32xf32>
    %21 = arith.mulf %18, %20 : vector<16x32xf32>
    %c0_7 = arith.constant 0 : index
    %c0_8 = arith.constant 0 : index
    %22 = vector.load %arg3[%c0_7, %c0_8] : memref<1x32xf32, #tpu.memory_space<vmem>>, vector<1x32xf32>
    %23 = vector.broadcast %22 : vector<1x32xf32> to vector<16x32xf32>
    %24 = arith.addf %21, %23 : vector<16x32xf32>
    %c0_9 = arith.constant 0 : index
    %c0_10 = arith.constant 0 : index
    %25 = vector.load %arg4[%c0_9, %c0_10] : memref<16x32xf32, #tpu.memory_space<vmem>>, vector<16x32xf32>
    tpu.vector_store %arg4[%c0_9, %c0_10], %24 {strides = array<i32>} : memref<16x32xf32, #tpu.memory_space<vmem>>, vector<16x32xf32>,
    return
  }
  func.func @transform_0(%arg0: i32) -> (i32, i32) {
    %c0_i32 = arith.constant 0 : i32
    %c0_i32_0 = arith.constant 0 : i32
    return %arg0, %c0_i32 : i32, i32
  }
  func.func @transform_1(%arg0: i32) -> (i32, i32) {
    %c0_i32 = arith.constant 0 : i32
    %c0_i32_0 = arith.constant 0 : i32
    %c0_i32_1 = arith.constant 0 : i32
    return %c0_i32, %c0_i32_0 : i32, i32
  }
  func.func @transform_2(%arg0: i32) -> (i32, i32) {
    %c0_i32 = arith.constant 0 : i32
    %c0_i32_0 = arith.constant 0 : i32
    %c0_i32_1 = arith.constant 0 : i32
    return %c0_i32, %c0_i32_0 : i32, i32
  }
  func.func @transform_3(%arg0: i32) -> (i32, i32) {
    %c0_i32 = arith.constant 0 : i32
    %c0_i32_0 = arith.constant 0 : i32
    return %arg0, %c0_i32 : i32, i32
  }
}

</mosaic_0001>

<llo_original>
// kernel: tpu_custom_call.1
$region0: #{tpu_custom_call.1}
  #allocation0 [shape = 'u32[]', space=smem, size = 0x4, offset = 0x4, fixed_abs, tag = 'smem constant byte address 0x4 - core index']
  #allocation1 [shape = 'u32[144,128]{1,0:T(1,128)}', space=vmem, size = 0x12000, scoped, tag = 'internal scratch']
  %s0 = inlined_call_operand.hbm [shape: f32[16,32], index: 0, kind: input, shape index: {}]
  %s1 = inlined_call_operand.vmem [shape: f32[1,32], index: 1, kind: input, shape index: {}]
  %s2 = inlined_call_operand.vmem [shape: f32[1,32], index: 2, kind: input, shape index: {}]
  %s3 = inlined_call_operand.hbm [shape: f32[16,32], index: 3, kind: output, shape index: {}]
  %s4 = sld [smem:[#allocation0]]
  $region26: #{tpu_custom_call.1} parent=0
    _
  %s6 = ssub.s32 1, %s4
  %s7 = scalar_select 0, %s6, %s4
  $region1: #{tpu_custom_call.1} parent=0
    #allocation2 [shape = 'u8[8192]{0}', space=vmem, size = 0x2000, scoped, tag = 'input window, operand 0, single buffered']
    #allocation3 [shape = 's32[1]{0}', space=sflag, size = 0x4, scoped, tag = 'scoped memory for tpu_custom_call.1']
    #allocation4 [shape = 's32[1]{0}', space=sflag, size = 0x4, scoped, tag = 'scoped memory for tpu_custom_call.1']
    #allocation5 [shape = 'u8[8192]{0}', space=vmem, size = 0x2000, scoped, tag = 'output window, operand 0, single buffered']
    %8 = vsyncpa [#allocation3], 0
    %9 = vsyncpa [#allocation4], 0
    // Predicated region
    $region2: #{tpu_custom_call.1} parent=1 // pred_check
      _
    $region3: #{tpu_custom_call.1} parent=1 // pred_check_branch
      %11 = sbr.rel (0) target = $region5
    $region4: #{tpu_custom_call.1} parent=1 // pred_region
      %s13 = ssub.s32 256, 256
      %14 = vsyncadd [#allocation3], %s13
      %s15 = sshll.u32 [#allocation2], 4
      %s16 = int_to_ptr.vmem [resolvable:$true] %s15
      %21 = dma.hbm_to_vmem [thread:$0]  %s0, 256, %s16, [#allocation3], 128, 128, 8
    $region5: #{tpu_custom_call.1} parent=1 // pred_fallthru
      _
    // Predicated region
    $region6: #{tpu_custom_call.1} parent=1 // pred_check
      _
    $region7: #{tpu_custom_call.1} parent=1 // pred_check_branch
      %23 = sbr.rel (0) target = $region9
    $region8: #{tpu_custom_call.1} parent=1 // pred_region
      _
    $region9: #{tpu_custom_call.1} parent=1 // pred_fallthru
      _
    // Predicated region
    $region10: #{tpu_custom_call.1} parent=1 // pred_check
      _
    $region11: #{tpu_custom_call.1} parent=1 // pred_check_branch
      %25 = sbr.rel (0) target = $region13
    $region12: #{tpu_custom_call.1} parent=1 // pred_region
      _
    $region13: #{tpu_custom_call.1} parent=1 // pred_fallthru
      _
    // Predicated region
    $region14: #{tpu_custom_call.1} parent=1 // pred_check
      _
    $region15: #{tpu_custom_call.1} parent=1 // pred_check_branch
      %27 = sbr.rel (0) target = $region17
    $region16: #{tpu_custom_call.1} parent=1 // pred_region
      %28 = dma.done [#allocation3], 256
    $region17: #{tpu_custom_call.1} parent=1 // pred_fallthru
      _
    %v29 = vld [vmem:[#allocation2] sm:$0xff]
    %v30 = vld [vmem:[#allocation2 + $0x8] sm:$0xff]
    %vm31 = vcmask 261120
    %v32 = vsel %vm31, %v29, 0.0
    %33 = vadd.xlane.f32.xlu0 %v32
    %v34 = vpop.xlane.xlu0 %33
    %v35 = vsel %vm31, %v30, 0.0
    %36 = vadd.xlane.f32.xlu0 %v35
    %v37 = vpop.xlane.xlu0 %36
    %v38 = vrcp.pop 32.0
    %v39 = vmul.f32 %v34, %v38
    %v40 = vmul.f32 %v37, %v38
    %v41 = vsub.f32 %v29, %v39
    %v42 = vsub.f32 %v30, %v40
    %v43 = vmul.f32 %v41, %v41
    %v44 = vmul.f32 %v42, %v42
    %v45 = vsel %vm31, %v43, 0.0
    %46 = vadd.xlane.f32.xlu0 %v45
    %v47 = vpop.xlane.xlu0 %46
    %v48 = vsel %vm31, %v44, 0.0
    %49 = vadd.xlane.f32.xlu0 %v48
    %v50 = vpop.xlane.xlu0 %49
    %v51 = vmul.f32 %v47, %v38
    %v52 = vmul.f32 %v50, %v38
    %v53 = vadd.f32 %v51, 1e-12
    %v54 = vadd.f32 %v52, 1e-12
    %v55 = vrsqrt.pop %v53
    %v56 = vrsqrt.pop %v54
    %v57 = vmul.f32 %v41, %v55
    %v58 = vmul.f32 %v42, %v56
    %v59 = vld [vmem:[%s1] sm:$0x1]
    %v61 = vlaneseq
    %v62 = vshrl.u32 %v61, 7
    %v63 = vsub.s32 0, %v62
    %v64 = vrot.slane %v59, %v63
    %v66 = vmul.f32 %v57, %v64
    %v67 = vmul.f32 %v58, %v64
    %v68 = vld [vmem:[%s2] sm:$0x1]
    %v70 = vlaneseq
    %v71 = vshrl.u32 %v70, 7
    %v72 = vsub.s32 0, %v71
    %v73 = vrot.slane %v68, %v72
    %v75 = vadd.f32 %v66, %v73
    %v76 = vadd.f32 %v67, %v73
    %77 = vst.msk [vmem:[#allocation5] sm:$0xff] %vm31, %v75
    %78 = vst.msk [vmem:[#allocation5 + $0x8] sm:$0xff] %vm31, %v76
    // Predicated region
    $region18: #{tpu_custom_call.1} parent=1 // pred_check
      _
    $region19: #{tpu_custom_call.1} parent=1 // pred_check_branch
      %80 = sbr.rel (0) target = $region21
    $region20: #{tpu_custom_call.1} parent=1 // pred_region
      %s82 = ssub.s32 256, 256
      %83 = vsyncadd [#allocation4], %s82
      %s84 = sshll.u32 [#allocation5], 4
      %s85 = int_to_ptr.vmem [resolvable:$true] %s84
      %90 = dma.vmem_to_hbm [thread:$0]  %s85, 256, %s3, [#allocation4], 128, 128, 8
    $region21: #{tpu_custom_call.1} parent=1 // pred_fallthru
      _
    // Predicated region
    $region22: #{tpu_custom_call.1} parent=1 // pred_check
      _
    $region23: #{tpu_custom_call.1} parent=1 // pred_check_branch
      %92 = sbr.rel (0) target = $region25
    $region24: #{tpu_custom_call.1} parent=1 // pred_region
      %93 = dma.done [#allocation4], 256
    $region25: #{tpu_custom_call.1} parent=1 // pred_fallthru
      _
    %94 = vsyncpa [#allocation3], 1
    %95 = vsyncpa [#allocation4], 1

</llo_original>
